<compile_context>
chip_gen: v6e
topology: v6e:2x2x1
jax: 0.10.0
libtpu: 0.0.40
codegen_flags: <defaults>
</compile_context>

<pallas_src>
import functools

import jax
import jax.numpy as jnp
from jax.experimental import pallas as pl
from jax.experimental.pallas import tpu as pltpu

ALPHA = 1.0
GAMMA = 2.0


def _vmem_capacity_bytes() -> int:
    """Best-effort per-TensorCore VMEM capacity; conservative fallback."""
    try:
        info = pltpu.get_tpu_info()
        for attr in ("vmem_capacity_bytes", "vmem_size_bytes", "vmem_bytes"):
            v = getattr(info, attr, None)
            if v:
                return int(v)
    except Exception:
        pass
    return 64 * 1024 * 1024  # assume v7x-class (64 MiB / TC) if unknown


def _tile_params(n: int, c: int, itemsize: int):
    """Row-tile size + VMEM limit, sized against the f32 working set.

    The kernel is HBM-streaming; the lever is block size vs ~0.35 us per grid
    step.  The in-kernel cast plus shifted/exp/iota/select temporaries keep
    roughly 5x rows*C*4 bytes live, plus the double-buffered native-dtype
    input, so we budget on that rather than on the streamed bytes.
    """
    vmem_cap = _vmem_capacity_bytes()
    if vmem_cap <= 64 * 1024 * 1024:          # v7x-class TensorCore (64 MiB)
        f32_block_budget = 6 * 1024 * 1024    # ~5x live ≈ 30 MiB + dbl-buffered input
        vmem_limit = 56 * 1024 * 1024
    else:                                     # v5e / v6e (128 MiB physical VMEM)
        f32_block_budget = 12 * 1024 * 1024   # ~5x live ≈ 60 MiB + dbl-buffered input
        vmem_limit = 96 * 1024 * 1024

    rows = f32_block_budget // max(1, c * 4)
    tile_n = max(8, (rows // 8) * 8)

    # Never exceed the (8-padded) problem size, and keep >= 2 grid steps when
    # possible so v7x's two TensorCores can split the "parallel" grid and the
    # input pipeline has something to overlap.
    n_up8 = -(-n // 8) * 8
    tile_n = min(tile_n, n_up8)
    if tile_n >= n and n_up8 >= 16:
        tile_n = -(-(n_up8 // 2) // 8) * 8
    return tile_n, vmem_limit


def _focal_loss_kernel(logits_ref, targets_ref, out_ref, *, n_valid, tile_n,
                       alpha, gamma):
    # logits_ref: (TILE_N, C) native dtype; targets_ref: (TILE_N, 1) int32
    # out_ref:    (1, 8, 128) f32 -- per-tile partial sum, replicated.
    i = pl.program_id(0)

    logits = logits_ref[...].astype(jnp.float32)      # cast per-tile, in VMEM
    targets = targets_ref[...]                        # (TILE_N, 1) int32
    tn, c = logits.shape

    # One-hot select mask, built once and reused for both fused gathers.
    class_ids = jax.lax.broadcasted_iota(jnp.int32, (tn, c), 1)
    is_target = class_ids == targets                  # (TILE_N, C)

    # --- bulk, lane-dense pass over the (TILE_N, C) block ---
    row_max = jnp.max(logits, axis=-1, keepdims=True)             # (TILE_N, 1)
    shifted = logits - row_max                                    # (TILE_N, C)
    exp_shifted = jnp.exp(shifted)                                # (TILE_N, C)
    sum_exp = jnp.sum(exp_shifted, axis=-1, keepdims=True)        # (TILE_N, 1)
    target_shifted = jnp.sum(jnp.where(is_target, shifted, 0.0),
                             axis=-1, keepdims=True)              # (TILE_N, 1)
    target_exp = jnp.sum(jnp.where(is_target, exp_shifted, 0.0),
                         axis=-1, keepdims=True)                  # (TILE_N, 1)

    # --- lane-sparse per-row epilogue: one log + one reciprocal per row ---
    # pt = target_exp / sum_exp replaces exp(-ce): one fewer EUP push per row;
    # exact reciprocal keeps us within f32 rounding of the reference.
    # TODO(synk): optional (TILE_N//128, 128) relayout of the per-row columns
    # would lift the 1/128 lane utilization of this chain; skipped (reshape
    # crosses (8,128) tiles and the big win -- dropping exp(-ce) -- is done).
    ce = jnp.log(sum_exp) - target_shifted                        # (TILE_N, 1)
    pt = target_exp * pl.reciprocal(sum_exp)                      # (TILE_N, 1)
    one_minus_pt = jnp.maximum(1.0 - pt, 0.0)
    if float(gamma) == 2.0:
        mod = one_minus_pt * one_minus_pt            # VPU multiply, no pow
    else:
        # TODO(synk): general non-integer gamma falls back to pow (EUP log+exp).
        mod = one_minus_pt ** gamma
    focal = alpha * mod * ce                                      # (TILE_N, 1)

    # --- mask rows beyond the true N (ragged last block, no wrapper pad).
    # jnp.where is a select, so garbage / NaN / Inf in unread rows cannot leak.
    row_ids = jax.lax.broadcasted_iota(jnp.int32, (tn, 1), 0) + i * tile_n
    focal = jnp.where(row_ids < n_valid, focal, 0.0)

    partial = jnp.sum(focal)                                      # scalar f32
    out_ref[...] = jnp.broadcast_to(partial, out_ref.shape).astype(jnp.float32)


def focal_loss(logits: jax.Array, targets: jax.Array,
               alpha: float = ALPHA, gamma: float = GAMMA) -> jax.Array:
    """logits: (N, C) float (any dtype); targets: (N,) int class labels.
    Returns scalar f32 mean focal loss."""
    n, c = logits.shape
    itemsize = jnp.dtype(logits.dtype).itemsize
    targets_2d = targets.astype(jnp.int32).reshape(n, 1)

    tile_n, vmem_limit = _tile_params(n, c, itemsize)
    num_tiles = pl.cdiv(n, tile_n)

    kernel = functools.partial(
        _focal_loss_kernel,
        n_valid=n, tile_n=tile_n, alpha=float(alpha), gamma=float(gamma))

    partials = pl.pallas_call(
        kernel,
        out_shape=jax.ShapeDtypeStruct((num_tiles, 8, 128), jnp.float32),
        grid_spec=pl.GridSpec(
            grid=(num_tiles,),
            in_specs=[
                pl.BlockSpec((tile_n, c), lambda i: (i, 0)),
                pl.BlockSpec((tile_n, 1), lambda i: (i, 0)),
            ],
            out_specs=pl.BlockSpec((1, 8, 128), lambda i: (i, 0, 0)),
        ),
        compiler_params=pltpu.CompilerParams(
            dimension_semantics=("parallel",),
            vmem_limit_bytes=vmem_limit,
        ),
        cost_estimate=pl.CostEstimate(
            flops=int(6 * n * c + 12 * n),
            transcendentals=int(n * c + 2 * n),
            bytes_accessed=int(n * c * itemsize + n * 4
                               + num_tiles * 8 * 128 * 4),
        ),
    )(logits, targets_2d)

    # Tiny final reduction (num_tiles scalars) in plain JAX; mean over true N.
    return jnp.sum(partials[:, 0, 0]) / jnp.float32(n)


def focal_loss_ref(logits, targets, alpha=ALPHA, gamma=GAMMA):
    """Pure-JAX reference matching torch's F.cross_entropy(reduction='none')."""
    logits = logits.astype(jnp.float32)
    logsumexp = jax.nn.logsumexp(logits, axis=-1)
    target_logit = jnp.take_along_axis(logits, targets[:, None], axis=-1)[:, 0]
    ce = logsumexp - target_logit
    pt = jnp.exp(-ce)
    return jnp.mean(alpha * (1.0 - pt) ** gamma * ce)


if __name__ == "__main__":
    key = jax.random.PRNGKey(0)
    k_logits, k_targets = jax.random.split(key)

    # Small shapes; N deliberately NOT a multiple of the tile size so the
    # padding-free ragged-last-block path (select mask) is exercised, and the
    # grid still has 2 steps (dual-TC-friendly sizing path).
    N, C = 10, 16
    logits = jax.random.normal(k_logits, (N, C), dtype=jnp.float32)
    targets = jax.random.randint(k_targets, (N,), 0, C, dtype=jnp.int32)

    loss = focal_loss(logits, targets)
    jax.block_until_ready(loss)

    ref = focal_loss_ref(logits, targets)
    assert jnp.allclose(loss, ref, atol=1e-5, rtol=1e-5), (loss, ref)

    print("KERNEL_OK")
</pallas_src>

<mosaic_0001>
module attributes {stable_mosaic.version = 11 : i64} {
  func.func @_focal_loss_kernel(%arg0: i32, %arg1: memref<8x16xf32, #tpu.memory_space<vmem>>, %arg2: memref<8x1xi32, #tpu.memory_space<vmem>>, %arg3: memref<1x8x128xf32, #tpu.memory_space<vmem>>) attributes {dimension_semantics = [#tpu.dimension_semantics<parallel>], iteration_bounds = array<i64: 2>, scalar_prefetch = 0 : i64, scratch_operands = 0 : i64, tpu.core_type = #tpu.core_type<tc>, window_params = [{transform_indices = @transform_0, window_bounds = array<i64: 8, 16>}, {transform_indices = @transform_1, window_bounds = array<i64: 8, 1>}, {transform_indices = @transform_2, window_bounds = array<i64: 1, 8, 128>}]} {
    %c0 = arith.constant 0 : index
    %c0_0 = arith.constant 0 : index
    %0 = vector.load %arg1[%c0, %c0_0] : memref<8x16xf32, #tpu.memory_space<vmem>>, vector<8x16xf32>
    %c0_1 = arith.constant 0 : index
    %c0_2 = arith.constant 0 : index
    %1 = vector.load %arg2[%c0_1, %c0_2] : memref<8x1xi32, #tpu.memory_space<vmem>>, vector<8x1xi32>
    %2 = tpu.iota {dimensions = array<i32: 1>} : vector<8x16xi32>
    %3 = vector.broadcast %1 : vector<8x1xi32> to vector<8x16xi32>
    %4 = arith.cmpi eq, %2, %3 : vector<8x16xi32>
    %cst = arith.constant dense<0xFF800000> : vector<8xf32>
    %5 = vector.multi_reduction <maximumf>, %0, %cst [1] : vector<8x16xf32> to vector<8xf32>
    %6 = vector.shape_cast %5 : vector<8xf32> to vector<8x1xf32>
    %7 = vector.broadcast %6 : vector<8x1xf32> to vector<8x16xf32>
    %8 = arith.subf %0, %7 : vector<8x16xf32>
    %9 = math.exp %8 : vector<8x16xf32>
    %cst_3 = arith.constant dense<0.000000e+00> : vector<8xf32>
    %10 = vector.multi_reduction <add>, %9, %cst_3 [1] : vector<8x16xf32> to vector<8xf32>
    %11 = vector.shape_cast %10 : vector<8xf32> to vector<8x1xf32>
    %cst_4 = arith.constant 0.000000e+00 : f32
    %12 = vector.broadcast %cst_4 : f32 to vector<8x16xf32>
    %13 = arith.select %4, %8, %12 : vector<8x16xi1>, vector<8x16xf32>
    %cst_5 = arith.constant dense<0.000000e+00> : vector<8xf32>
    %14 = vector.multi_reduction <add>, %13, %cst_5 [1] : vector<8x16xf32> to vector<8xf32>
    %15 = vector.shape_cast %14 : vector<8xf32> to vector<8x1xf32>
    %cst_6 = arith.constant 0.000000e+00 : f32
    %16 = vector.broadcast %cst_6 : f32 to vector<8x16xf32>
    %17 = arith.select %4, %9, %16 : vector<8x16xi1>, vector<8x16xf32>
    %cst_7 = arith.constant dense<0.000000e+00> : vector<8xf32>
    %18 = vector.multi_reduction <add>, %17, %cst_7 [1] : vector<8x16xf32> to vector<8xf32>
    %19 = vector.shape_cast %18 : vector<8xf32> to vector<8x1xf32>
    %20 = math.log %11 : vector<8x1xf32>
    %21 = arith.subf %20, %15 : vector<8x1xf32>
    %22 = tpu.reciprocal %11 : vector<8x1xf32> -> vector<8x1xf32>
    %23 = arith.mulf %19, %22 : vector<8x1xf32>
    %cst_8 = arith.constant 1.000000e+00 : f32
    %24 = vector.broadcast %cst_8 : f32 to vector<8x1xf32>
    %25 = arith.subf %24, %23 : vector<8x1xf32>
    %cst_9 = arith.constant 0.000000e+00 : f32
    %26 = vector.broadcast %cst_9 : f32 to vector<8x1xf32>
    %27 = arith.maximumf %25, %26 : vector<8x1xf32>
    %28 = arith.mulf %27, %27 : vector<8x1xf32>
    %cst_10 = arith.constant 1.000000e+00 : f32
    %29 = vector.broadcast %cst_10 : f32 to vector<8x1xf32>
    %30 = arith.mulf %29, %28 : vector<8x1xf32>
    %31 = arith.mulf %30, %21 : vector<8x1xf32>
    %32 = tpu.iota {dimensions = array<i32: 0>} : vector<8x1xi32>
    %c8_i32 = arith.constant 8 : i32
    %33 = arith.muli %arg0, %c8_i32 : i32
    %34 = vector.broadcast %33 : i32 to vector<8x1xi32>
    %35 = arith.addi %32, %34 : vector<8x1xi32>
    %c10_i32 = arith.constant 10 : i32
    %36 = vector.broadcast %c10_i32 : i32 to vector<8x1xi32>
    %37 = arith.cmpi slt, %35, %36 : vector<8x1xi32>
    %cst_11 = arith.constant 0.000000e+00 : f32
    %38 = vector.broadcast %cst_11 : f32 to vector<8x1xf32>
    %39 = arith.select %37, %31, %38 : vector<8x1xi1>, vector<8x1xf32>
    %40 = vector.shape_cast %39 : vector<8x1xf32> to vector<1x8x1xf32>
    %cst_12 = arith.constant dense<0.000000e+00> : vector<1xf32>
    %41 = vector.multi_reduction <add>, %40, %cst_12 [1, 2] : vector<1x8x1xf32> to vector<1xf32>
    %42 = vector.shape_cast %41 : vector<1xf32> to vector<1x1x1xf32>
    %43 = vector.extract %42[0, 0, 0] : f32 from vector<1x1x1xf32>
    %44 = vector.broadcast %43 : f32 to vector<1x8x128xf32>
    %c0_13 = arith.constant 0 : index
    %c0_14 = arith.constant 0 : index
    %c0_15 = arith.constant 0 : index
    %45 = vector.load %arg3[%c0_13, %c0_14, %c0_15] : memref<1x8x128xf32, #tpu.memory_space<vmem>>, vector<1x8x128xf32>
    tpu.vector_store %arg3[%c0_13, %c0_14, %c0_15], %44 {strides = array<i32>} : memref<1x8x128xf32, #tpu.memory_space<vmem>>, vector<1x8x128xf32>,
    return
  }
  func.func @transform_0(%arg0: i32) -> (i32, i32) {
    %c0_i32 = arith.constant 0 : i32
    %c0_i32_0 = arith.constant 0 : i32
    return %arg0, %c0_i32 : i32, i32
  }
  func.func @transform_1(%arg0: i32) -> (i32, i32) {
    %c0_i32 = arith.constant 0 : i32
    %c0_i32_0 = arith.constant 0 : i32
    return %arg0, %c0_i32 : i32, i32
  }
  func.func @transform_2(%arg0: i32) -> (i32, i32, i32) {
    %c0_i32 = arith.constant 0 : i32
    %c0_i32_0 = arith.constant 0 : i32
    %c0_i32_1 = arith.constant 0 : i32
    return %arg0, %c0_i32, %c0_i32_0 : i32, i32, i32
  }
}

</mosaic_0001>

<llo_original>
// kernel: tpu_custom_call.1
$region0: #{tpu_custom_call.1}
  #allocation0 [shape = 'u32[]', space=smem, size = 0x4, offset = 0x4, fixed_abs, tag = 'smem constant byte address 0x4 - core index']
  #allocation1 [shape = 'u32[144,128]{1,0:T(1,128)}', space=vmem, size = 0x12000, scoped, tag = 'internal scratch']
  %s0 = inlined_call_operand.vmem [shape: f32[10,16], index: 0, kind: input, shape index: {}]
  %s1 = inlined_call_operand.vmem [shape: s32[10,1], index: 1, kind: input, shape index: {}]
  %s2 = inlined_call_operand.hbm [shape: f32[2,8,128], index: 2, kind: output, shape index: {}]
  %s3 = sld [smem:[#allocation0]]
  $region41: #{tpu_custom_call.1} parent=0
    _
  %s5 = ssub.s32 1, %s3
  %s6 = scalar_select 0, %s5, %s3
  $region1: #{tpu_custom_call.1} parent=0
    #allocation2 [shape = 'u8[8192]{0}', space=vmem, size = 0x2000, scoped, tag = 'output window, operand 0']
    #allocation3 [shape = 's32[2]{0}', space=sflag, size = 0x8, scoped, tag = 'scoped memory for tpu_custom_call.1']
    %7 = vsyncpa [#allocation3], 0
    %s8 = scalar_lea.sflag [#allocation3], 1
    %9 = vsyncpa %s8, 0
    loop: start=0, step=1, limit=4
    $region2: #{tpu_custom_call.1} parent=1 // loop_pre_header
      _
    $region3: #{tpu_custom_call.1} parent=1 // loop_header
      %s11 = sphi 0, %s15
      %p12 = scmp.ge.s32.totalorder %s11, 4
      %s21 = sphi 0, %s23
      %s24 = sphi 0, %s21
      %s25 = sphi 0, %s24
      %s41 = sphi 0, %s25
      %s47 = sphi 0, %s49
      %s50 = sphi 0, %s47
      %s51 = sphi 0, %s50
      %s67 = sphi 0, %s51
      %s73 = sphi 0, %s75
      %s76 = sphi 0, %s73
      %s77 = sphi 0, %s76
      %s93 = sphi 0, %s77
    $region4: #{tpu_custom_call.1} parent=1 // loop_header_branch
      %14 = sbr.rel (%p12) target = $region8
    $region5: #{tpu_custom_call.1} parent=1 // loop_body
      %s16 = ssub.s32 %s11, 1
      %s17 = ssub.s32 %s11, 2
      %s18 = sadd.s32 %s11, 1
      %s19 = ssub.s32 %s11, %s18
      %p20 = scmp.eq.s32.totalorder %s19, 0
      %s22 = sadd.s32 %s21, 1
      %s23 = scalar_select %p20, %s21, %s22
      %p26 = pneg %p20
      %p27 = scmp.eq.s32.totalorder %s11, 1
      %p28 = por %p26, %p27
      %p29 = scmp.ne.s32.totalorder %s21, %s24
      %p30 = scmp.eq.s32.totalorder %s11, 0
      %p31 = por %p29, %p30
      %p32 = scmp.ne.s32.totalorder %s21, %s24
      %p33 = scmp.eq.s32.totalorder %s16, 1
      %p34 = por %p32, %p33
      %p35 = scmp.ne.s32.totalorder %s24, %s25
      %p36 = scmp.eq.s32.totalorder %s16, 0
      %p37 = por %p35, %p36
      %p38 = scmp.ne.s32.totalorder %s24, %s25
      %p39 = scmp.eq.s32.totalorder %s17, 1
      %p40 = por %p38, %p39
      %p42 = scmp.ne.s32.totalorder %s25, %s41
      %p43 = scmp.eq.s32.totalorder %s17, 0
      %p44 = por %p42, %p43
      %s45 = ssub.s32 %s11, %s18
      %p46 = scmp.eq.s32.totalorder %s45, 0
      %s48 = sadd.s32 %s47, 1
      %s49 = scalar_select %p46, %s47, %s48
      %p52 = pneg %p46
      %p53 = scmp.eq.s32.totalorder %s11, 1
      %p54 = por %p52, %p53
      %p55 = scmp.ne.s32.totalorder %s47, %s50
      %p56 = scmp.eq.s32.totalorder %s11, 0
      %p57 = por %p55, %p56
      %p58 = scmp.ne.s32.totalorder %s47, %s50
      %p59 = scmp.eq.s32.totalorder %s16, 1
      %p60 = por %p58, %p59
      %p61 = scmp.ne.s32.totalorder %s50, %s51
      %p62 = scmp.eq.s32.totalorder %s16, 0
      %p63 = por %p61, %p62
      %p64 = scmp.ne.s32.totalorder %s50, %s51
      %p65 = scmp.eq.s32.totalorder %s17, 1
      %p66 = por %p64, %p65
      %p68 = scmp.ne.s32.totalorder %s51, %s67
      %p69 = scmp.eq.s32.totalorder %s17, 0
      %p70 = por %p68, %p69
      %s71 = ssub.s32 %s11, %s18
      %p72 = scmp.eq.s32.totalorder %s71, 0
      %s74 = sadd.s32 %s73, 1
      %s75 = scalar_select %p72, %s73, %s74
      %p78 = pneg %p72
      %p79 = scmp.eq.s32.totalorder %s11, 1
      %p80 = por %p78, %p79
      %p81 = scmp.ne.s32.totalorder %s73, %s76
      %p82 = scmp.eq.s32.totalorder %s11, 0
      %p83 = por %p81, %p82
      %p84 = scmp.ne.s32.totalorder %s73, %s76
      %p85 = scmp.eq.s32.totalorder %s16, 1
      %p86 = por %p84, %p85
      %p87 = scmp.ne.s32.totalorder %s76, %s77
      %p88 = scmp.eq.s32.totalorder %s16, 0
      %p89 = por %p87, %p88
      %p90 = scmp.ne.s32.totalorder %s76, %s77
      %p91 = scmp.eq.s32.totalorder %s17, 1
      %p92 = por %p90, %p91
      %p94 = scmp.ne.s32.totalorder %s77, %s93
      %p95 = scmp.eq.s32.totalorder %s17, 0
      %p96 = por %p94, %p95
      %p97 = scmp.le.s32.totalorder 1, %s11
      %p98 = scmp.lt.s32.totalorder %s11, 3
      %p99 = pnand %p97, %p98
      %p100 = pneg %p99
      // Predicated region
      $region9: #{tpu_custom_call.1} parent=5 // pred_check
        _
      $region10: #{tpu_custom_call.1} parent=5 // pred_check_branch
        %102 = sbr.rel (%p99) target = $region12
      $region11: #{tpu_custom_call.1} parent=5 // pred_region
        %s103 = ssub.s32 %s11, 1
      $region12: #{tpu_custom_call.1} parent=5 // pred_fallthru
        _
      %p104 = scmp.lt.s32.totalorder %s11, 2
      // Predicated region
      $region13: #{tpu_custom_call.1} parent=5 // pred_check
        %p105 = pneg %p104
      $region14: #{tpu_custom_call.1} parent=5 // pred_check_branch
        %107 = sbr.rel (%p105) target = $region16
      $region15: #{tpu_custom_call.1} parent=5 // pred_region
        // Predicated region
        $region17: #{tpu_custom_call.1} parent=15 // pred_check
          %p108 = pneg %p31
        $region18: #{tpu_custom_call.1} parent=15 // pred_check_branch
          %110 = sbr.rel (%p108) target = $region20
        $region19: #{tpu_custom_call.1} parent=15 // pred_region
          %p111 = scmp.lt.s32.totalorder %s11, 1
          %s112 = scalar_select %p111, %s11, 1
          %s113 = smul.addr %s112, 8
          %s114 = scalar_lea.vmem %s0, %s113
        $region20: #{tpu_custom_call.1} parent=15 // pred_fallthru
          _
        // Predicated region
        $region21: #{tpu_custom_call.1} parent=15 // pred_check
          %p115 = pneg %p57
        $region22: #{tpu_custom_call.1} parent=15 // pred_check_branch
          %117 = sbr.rel (%p115) target = $region24
        $region23: #{tpu_custom_call.1} parent=15 // pred_region
          %p118 = scmp.lt.s32.totalorder %s11, 1
          %s119 = scalar_select %p118, %s11, 1
          %s120 = smul.addr %s119, 8
          %s121 = scalar_lea.vmem %s1, %s120
        $region24: #{tpu_custom_call.1} parent=15 // pred_fallthru
          _
      $region16: #{tpu_custom_call.1} parent=5 // pred_fallthru
        _
      %p122 = scmp.le.s32.totalorder 1, %s11
      %p123 = scmp.lt.s32.totalorder %s11, 3
      %p124 = pnand %p122, %p123
      %p125 = pneg %p124
      // Predicated region
      $region25: #{tpu_custom_call.1} parent=5 // pred_check
        _
      $region26: #{tpu_custom_call.1} parent=5 // pred_check_branch
        %127 = sbr.rel (%p124) target = $region28
      $region27: #{tpu_custom_call.1} parent=5 // pred_region
        %s128 = ssub.s32 %s11, 1
        %p129 = scmp.lt.s32.totalorder %s16, 1
        %s130 = scalar_select %p129, %s16, 1
        %s131 = smul.addr %s130, 8
        %s132 = scalar_lea.vmem %s0, %s131
        %p133 = pneg %p37
        %p134 = pneg %p34
        %p135 = scmp.lt.s32.totalorder %s16, 1
        %s136 = scalar_select %p135, %s16, 1
        %s137 = smul.addr %s136, 8
        %s138 = scalar_lea.vmem %s1, %s137
        %p139 = pneg %p63
        %p140 = pneg %p60
        %p141 = pneg %p89
        %p142 = pneg %p86
        %s143 = sand.u32 %s76, 1
        %s144 = scalar_lea.sflag [#allocation3], %s143
        %s145 = sand.u32 %s76, 1
        %s146 = smul.addr %s145, 8
        %s147 = scalar_lea.vmem [#allocation2], %s146
        %p148 = scmp.lt.s32.totalorder %s16, 1
        %s149 = scalar_select %p148, %s16, 1
        %s150 = smul.addr %s149, 8
        %s151 = scalar_lea.vmem %s0, %s150
        %p152 = scmp.lt.s32.totalorder %s16, 1
        %s153 = scalar_select %p152, %s16, 1
        %s154 = smul.addr %s153, 8
        %s155 = scalar_lea.vmem %s1, %s154
        %v156 = vld [vmem:[%s151] sm:$0xff]
        %v157 = vld [vmem:[%s155] sm:$0xff]
        %v158 = vlaneseq
        %v159 = vand.u32 %v158, 127
        %160 = vset.pattern.permute.xlu0 0
        %161 = vperm.xlu0 %160, %v157
        %v162 = vpop.permute.xlu0 %161
        %vm163 = vcmp.eq.s32.totalorder %v159, %v162
        %vm164 = vcmask 130048
        %v165 = vsel %vm164, %v156, -inf
        %166 = vmax.xlane.f32.xlu0 %v165
        %v167 = vpop.xlane.xlu0 %166
        %v168 = vsub.f32 %v156, %v167
        %v169 = vmul.f32 %v168, 1.442695
        %v170 = vpow.pop %v169
        %v171 = vsel %vm164, %v170, 0.0
        %172 = vadd.xlane.f32.xlu0 %v171
        %v173 = vpop.xlane.xlu0 %172
        %v174 = vsel %vm163, %v168, 0.0
        %v175 = vsel %vm164, %v174, 0.0
        %176 = vadd.xlane.f32.xlu0 %v175
        %v177 = vpop.xlane.xlu0 %176
        %v178 = vsel %vm163, %v170, 0.0
        %v179 = vsel %vm164, %v178, 0.0
        %180 = vadd.xlane.f32.xlu0 %v179
        %v181 = vpop.xlane.xlu0 %180
        %v182 = vlog2.pop %v173
        %v183 = vmul.f32 %v182, 0.6931472
        %v184 = vsub.f32 %v183, %v177
        %v185 = vrcp.pop %v173
        %v186 = vmul.f32 %v181, %v185
        %v187 = vsub.f32 1.0, %v186
        %v188 = vmax.f32 %v187, 0.0
        %v189 = vmul.f32 %v188, %v188
        %v190 = vmul.f32 %v189, %v184
        %v191 = vlaneseq
        %v192 = vshrl.u32 %v191, 7
        %s193 = smul.u32 %s16, 8
        %v194 = vstv %s193
        %v195 = vadd.s32 %v192, %v194
        %vm196 = vcmp.lt.s32.totalorder %v195, 10
        %v197 = vsel %vm196, %v190, 0.0
        %vm198 = vcmask 7168
        %v199 = vsel %vm198, %v197, 0.0
        %200 = vadd.xlane.f32.xlu0 %v199
        %v201 = vpop.xlane.xlu0 %200
        %v202 = vrot.slane %v201, 4
        %v203 = vadd.f32 %v201, %v202
        %v204 = vrot.slane %v203, 2
        %v205 = vadd.f32 %v203, %v204
        %v206 = vrot.slane %v205, 1
        %v207 = vadd.f32 %v205, %v206
        %s208 = vtos %v207
        %v209 = vstv %s208
        %210 = vst [vmem:[%s147] sm:$0xff] %v209
        %s211 = sand.u32 %s76, 1
        %s212 = scalar_lea.sflag [#allocation3], %s211
        %s213 = sand.u32 %s76, 1
        %s214 = smul.addr %s213, 8
        %s215 = scalar_lea.vmem [#allocation2], %s214
        // Predicated region
        $region29: #{tpu_custom_call.1} parent=27 // pred_check
          %p216 = pneg %p86
        $region30: #{tpu_custom_call.1} parent=27 // pred_check_branch
          %218 = sbr.rel (%p216) target = $region32
        $region31: #{tpu_custom_call.1} parent=27 // pred_region
          %s220 = ssub.s32 128, 128
          %221 = vsyncadd %s212, %s220
          %s222 = smul.addr %s16, 128
          %s223 = scalar_lea.hbm %s2, %s222
          %s225 = sshll.u32 %s215, 4
          %s226 = int_to_ptr.vmem [resolvable:$true] %s225
          %228 = dma.vmem_to_hbm [thread:$0]  %s226, 128, %s223, %s212
        $region32: #{tpu_custom_call.1} parent=27 // pred_fallthru
          _
      $region28: #{tpu_custom_call.1} parent=5 // pred_fallthru
        _
      %p229 = scmp.le.s32.totalorder 2, %s11
      // Predicated region
      $region33: #{tpu_custom_call.1} parent=5 // pred_check
        %p230 = pneg %p229
      $region34: #{tpu_custom_call.1} parent=5 // pred_check_branch
        %232 = sbr.rel (%p230) target = $region36
      $region35: #{tpu_custom_call.1} parent=5 // pred_region
        %s233 = ssub.s32 %s11, 2
        // Predicated region
        $region37: #{tpu_custom_call.1} parent=35 // pred_check
          %p234 = pneg %p92
        $region38: #{tpu_custom_call.1} parent=35 // pred_check_branch
          %236 = sbr.rel (%p234) target = $region40
        $region39: #{tpu_custom_call.1} parent=35 // pred_region
          %s237 = sand.u32 %s77, 1
          %s238 = scalar_lea.sflag [#allocation3], %s237
          %s239 = sand.u32 %s77, 1
          %s240 = smul.addr %s239, 8
          %s241 = scalar_lea.vmem [#allocation2], %s240
          %242 = dma.done %s238, 128
        $region40: #{tpu_custom_call.1} parent=35 // pred_fallthru
          _
      $region36: #{tpu_custom_call.1} parent=5 // pred_fallthru
        _
    $region6: #{tpu_custom_call.1} parent=1 // loop_footer
      %s15 = sadd.s32 1, %s11
    $region7: #{tpu_custom_call.1} parent=1 // loop_footer_branch
      %10 = sbr.rel target = $region3
    $region8: #{tpu_custom_call.1} parent=1 // loop_exit
      _
    %243 = vsyncpa [#allocation3], 1
    %s244 = scalar_lea.sflag [#allocation3], 1
    %245 = vsyncpa %s244, 1

</llo_original>
